<compile_context>
chip_gen: v7x
topology: tpu7x:2x2x1
jax: 0.10.0
libtpu: 0.0.40
codegen_flags: <defaults>
</compile_context>

<pallas_src>
import jax
import jax.numpy as jnp
from jax.experimental import pallas as pl
from jax.experimental.pallas import tpu as pltpu


def _pos_embed_kernel(table_ref, keep_ref, o_ref):
    # table_ref: (TL, D)       positional-table rows for this L-tile (reused across batch)
    # keep_ref:  (TB, TL, 1)   keep mask in the weight dtype (1.0 = keep, 0.0 = dropped)
    # o_ref:     (TB, TL, D)
    table = table_ref[...]                     # (TL, D), lane-dense on D
    keep = keep_ref[...]                       # (TB, TL, 1)
    o_ref[...] = (table[None, :, :] * keep).astype(o_ref.dtype)


def _vmem_capacity_bytes():
    """Physical VMEM for the current TPU generation (fallback: conservative 64 MiB = v7x)."""
    try:
        cap = int(pltpu.get_tpu_info().vmem_capacity_bytes)
        if cap > 0:
            return cap
    except Exception:
        pass
    return 64 * 1024 * 1024


def positional_embedding_fwd(pe_weight, keep_f, max_len, *, tile_l=None, tile_b=None):
    """pe_weight: (max_len + 3, d_model), last row zeroed.
    keep_f: (B, max_len, 1) in pe_weight.dtype (1.0 keep / 0.0 drop)."""
    d_model = pe_weight.shape[1]
    batch = keep_f.shape[0]
    dtype = pe_weight.dtype
    itemsize = jnp.dtype(dtype).itemsize

    vmem_cap = _vmem_capacity_bytes()
    # Output block is the dominant VMEM consumer. Target ~1/16 of physical VMEM per output
    # block: ~8 MiB on 128 MiB parts (v5e/v6e), ~4 MiB on 64 MiB v7x. Double-buffered
    # (out + table + keep) stays well below the scoped limit set further down.
    block_budget = max(256 * 1024, min(8 * 1024 * 1024, vmem_cap // 16))

    if tile_b is None:
        tile_b = min(batch, 8)
    tile_b = max(1, min(tile_b, batch))

    if tile_l is None:
        rows = block_budget // max(tile_b * d_model * itemsize, 1)
        tile_l = min(max_len, max(8, (rows // 8) * 8))
    # Block L-dim must be a sublane multiple (8) or span the full L extent.
    if tile_l % 8 != 0 or max_len < 8:
        tile_l = max_len
    tile_l = max(1, min(tile_l, max_len))

    num_l = pl.cdiv(max_len, tile_l)
    # Keep >= 2 parallel grid points when possible so v7x's two TensorCores both get work.
    if num_l == 1 and batch > 1 and tile_b >= batch:
        tile_b = (batch + 1) // 2
    num_b = pl.cdiv(batch, tile_b)

    if tile_l % 8 == 0:
        # Safe to address pe_weight directly: table blocks are (8,128)-legal, and any rows
        # read past max_len land only in masked (never-stored) output positions.
        table = pe_weight
    else:
        # tile_l == max_len (full-extent L block): slice so the block equals the full dim.
        table = pe_weight[:max_len]

    vmem_limit = int(min(64 * 1024 * 1024, max(32 * 1024 * 1024, vmem_cap // 2)))

    return pl.pallas_call(
        _pos_embed_kernel,
        out_shape=jax.ShapeDtypeStruct((batch, max_len, d_model), dtype),
        grid_spec=pltpu.PrefetchScalarGridSpec(
            num_scalar_prefetch=0,
            # Batch innermost: table block index is constant across consecutive steps, so
            # the table tile stays VMEM-resident and is DMA'd from HBM once per L-tile.
            grid=(num_l, num_b),
            in_specs=[
                pl.BlockSpec((tile_l, d_model), lambda l, b: (l, 0)),
                pl.BlockSpec((tile_b, tile_l, 1), lambda l, b: (b, l, 0)),
            ],
            out_specs=pl.BlockSpec((tile_b, tile_l, d_model), lambda l, b: (b, l, 0)),
        ),
        compiler_params=pltpu.CompilerParams(
            dimension_semantics=("parallel", "parallel"),
            vmem_limit_bytes=vmem_limit,
        ),
    )(table, keep_f)


def make_keep_mask(key, batch_size, max_len, dropout):
    """torch: masked_fill(rand >= 1 - dropout, -1)  =>  kept iff rand < 1 - dropout."""
    if dropout <= 0.0:
        return jnp.ones((batch_size, max_len), dtype=bool)
    # TODO(synk): exact torch.rand RNG stream cannot be reproduced; jax.random is
    # distributionally equivalent.
    u = jax.random.uniform(key, (batch_size, max_len))
    return u < (1.0 - dropout)


def positional_embedding(x, pe_weight, max_len, dropout=0.0, *, key=None):
    """Mirrors PositionalEmbedding.forward: only x.shape[0] (the batch size) is used."""
    batch_size = x.shape[0]
    d_model = pe_weight.shape[1]
    if dropout <= 0.0:
        # Module default: no dropout -> pure broadcast of the first max_len table rows.
        # Skip the kernel entirely; lets the consumer fuse it instead of writing B*L*D HBM.
        return jnp.broadcast_to(pe_weight[:max_len][None], (batch_size, max_len, d_model))
    if key is None:
        key = jax.random.PRNGKey(0)
    u = jax.random.uniform(key, (batch_size, max_len))
    # Single fused XLA pass: uniform -> compare -> cast to the weight dtype (0.0 / 1.0).
    keep_f = (u < (1.0 - dropout)).astype(pe_weight.dtype)[..., None]
    return positional_embedding_fwd(pe_weight, keep_f, max_len)


def positional_embedding_ref(pe_weight, keep, max_len):
    """Pure-JAX emulation of the torch forward (index build + masked_fill + gather)."""
    batch_size = keep.shape[0]
    idx = jnp.broadcast_to(jnp.arange(max_len)[None, :], (batch_size, max_len))
    pad_idx = pe_weight.shape[0] - 1                  # index -1 wraps to the zeroed last row
    idx = jnp.where(keep, idx, pad_idx)
    return jnp.take(pe_weight, idx, axis=0)


if __name__ == "__main__":
    key = jax.random.PRNGKey(0)
    kx, kw, km, kw2, km2 = jax.random.split(key, 5)

    # --- case 1: small, lane-dense d_model; tiny batch exercises the >=2-grid-point split ---
    B, MAX_LEN, D_MODEL = 2, 16, 128
    DROPOUT = 0.25

    # Token-id style input: forward() only uses its batch dimension.
    x = jax.random.randint(kx, (B, MAX_LEN), 0, MAX_LEN, dtype=jnp.int32)

    # nn.Embedding(max_len + 3, d_model) weights with the padding row zeroed, as in __init__.
    pe_weight = jax.random.normal(kw, (MAX_LEN + 3, D_MODEL), dtype=jnp.float32).at[-1].set(0.0)

    # dropout > 0 through the kernel, exact check against the gather reference.
    keep = make_keep_mask(km, B, MAX_LEN, DROPOUT)
    keep_f = keep.astype(pe_weight.dtype)[..., None]
    out = jax.block_until_ready(positional_embedding_fwd(pe_weight, keep_f, MAX_LEN))
    ref = positional_embedding_ref(pe_weight, keep, MAX_LEN)
    assert out.shape == (B, MAX_LEN, D_MODEL)
    assert jnp.allclose(out, ref, atol=1e-6, rtol=1e-6), "mismatch vs reference (dropout>0)"

    # all-kept mask through the kernel (dropout=0 semantics exercised on the kernel path).
    keep0 = jnp.ones((B, MAX_LEN), dtype=bool)
    out0 = jax.block_until_ready(
        positional_embedding_fwd(pe_weight, keep0.astype(pe_weight.dtype)[..., None], MAX_LEN))
    ref0 = positional_embedding_ref(pe_weight, keep0, MAX_LEN)
    assert jnp.allclose(out0, ref0, atol=1e-6, rtol=1e-6), "mismatch vs reference (all-kept)"

    # dropout == 0 fast path (no kernel, pure broadcast).
    fast = jax.block_until_ready(positional_embedding(x, pe_weight, MAX_LEN, 0.0))
    assert jnp.allclose(fast, ref0, atol=1e-6, rtol=1e-6), "mismatch fast path (dropout=0)"

    # end-to-end wrapper with dropout > 0 (same key -> same mask as `keep`).
    out_e2e = jax.block_until_ready(positional_embedding(x, pe_weight, MAX_LEN, DROPOUT, key=km))
    assert jnp.allclose(out_e2e, ref, atol=1e-6, rtol=1e-6), "mismatch wrapper (dropout>0)"

    # --- case 2: multi-block grid: table tile reused across inner batch steps,
    #             partial batch tile, multiple L-tiles ---
    B2, L2, D2 = 3, 24, 256
    pe_w2 = jax.random.normal(kw2, (L2 + 3, D2), dtype=jnp.float32).at[-1].set(0.0)
    keep2 = make_keep_mask(km2, B2, L2, DROPOUT)
    out2 = jax.block_until_ready(
        positional_embedding_fwd(pe_w2, keep2.astype(pe_w2.dtype)[..., None], L2,
                                 tile_l=8, tile_b=2))
    ref2 = positional_embedding_ref(pe_w2, keep2, L2)
    assert jnp.allclose(out2, ref2, atol=1e-6, rtol=1e-6), "mismatch vs reference (multi-block)"

    print("KERNEL_OK")
</pallas_src>

<mosaic_0001>
module attributes {stable_mosaic.version = 11 : i64} {
  func.func @_pos_embed_kernel(%arg0: i32, %arg1: i32, %arg2: memref<16x128xf32, #tpu.memory_space<vmem>>, %arg3: memref<1x16x1xf32, #tpu.memory_space<vmem>>, %arg4: memref<1x16x128xf32, #tpu.memory_space<vmem>>) attributes {dimension_semantics = [#tpu.dimension_semantics<parallel>, #tpu.dimension_semantics<parallel>], iteration_bounds = array<i64: 1, 2>, scalar_prefetch = 0 : i64, scratch_operands = 0 : i64, tpu.core_type = #tpu.core_type<tc>, window_params = [{transform_indices = @transform_0, window_bounds = array<i64: 16, 128>}, {transform_indices = @transform_1, window_bounds = array<i64: 1, 16, 1>}, {transform_indices = @transform_2, window_bounds = array<i64: 1, 16, 128>}]} {
    %c0 = arith.constant 0 : index
    %c0_0 = arith.constant 0 : index
    %0 = vector.load %arg2[%c0, %c0_0] : memref<16x128xf32, #tpu.memory_space<vmem>>, vector<16x128xf32>
    %c0_1 = arith.constant 0 : index
    %c0_2 = arith.constant 0 : index
    %c0_3 = arith.constant 0 : index
    %1 = vector.load %arg3[%c0_1, %c0_2, %c0_3] : memref<1x16x1xf32, #tpu.memory_space<vmem>>, vector<1x16x1xf32>
    %2 = vector.shape_cast %0 : vector<16x128xf32> to vector<1x16x128xf32>
    %3 = vector.broadcast %1 : vector<1x16x1xf32> to vector<1x16x128xf32>
    %4 = arith.mulf %2, %3 : vector<1x16x128xf32>
    %c0_4 = arith.constant 0 : index
    %c0_5 = arith.constant 0 : index
    %c0_6 = arith.constant 0 : index
    %5 = vector.load %arg4[%c0_4, %c0_5, %c0_6] : memref<1x16x128xf32, #tpu.memory_space<vmem>>, vector<1x16x128xf32>
    tpu.vector_store %arg4[%c0_4, %c0_5, %c0_6], %4 {strides = array<i32>} : memref<1x16x128xf32, #tpu.memory_space<vmem>>, vector<1x16x128xf32>,
    return
  }
  func.func @transform_0(%arg0: i32, %arg1: i32) -> (i32, i32) {
    %c0_i32 = arith.constant 0 : i32
    %c0_i32_0 = arith.constant 0 : i32
    return %arg0, %c0_i32 : i32, i32
  }
  func.func @transform_1(%arg0: i32, %arg1: i32) -> (i32, i32, i32) {
    %c0_i32 = arith.constant 0 : i32
    %c0_i32_0 = arith.constant 0 : i32
    return %arg1, %arg0, %c0_i32 : i32, i32, i32
  }
  func.func @transform_2(%arg0: i32, %arg1: i32) -> (i32, i32, i32) {
    %c0_i32 = arith.constant 0 : i32
    %c0_i32_0 = arith.constant 0 : i32
    return %arg1, %arg0, %c0_i32 : i32, i32, i32
  }
}

</mosaic_0001>

<llo_original>
// kernel: tpu_custom_call.1
$region0: #{tpu_custom_call.1}
  #allocation0 [shape = 'u32[]', space=smem, size = 0x4, offset = 0x4, fixed_abs, tag = 'smem constant byte address 0x4 - core index']
  #allocation1 [shape = 'u32[144,128]{1,0:T(1,128)}', space=vmem, size = 0x12000, scoped, tag = 'internal scratch']
  %s0 = inlined_call_operand.vmem [shape: f32[19,128], index: 0, kind: input, shape index: {}]
  %s1 = inlined_call_operand.vmem [shape: f32[2,16,1], index: 1, kind: input, shape index: {}]
  %s2 = inlined_call_operand.hbm [shape: f32[2,16,128], index: 2, kind: output, shape index: {}]
  %s3 = sld [smem:[#allocation0]]
  $region41: #{tpu_custom_call.1} parent=0
    _
  %s5 = ssub.s32 1, %s3
  %s6 = scalar_select 0, %s5, %s3
  $region1: #{tpu_custom_call.1} parent=0
    #allocation2 [shape = 'u8[16384]{0}', space=vmem, size = 0x4000, scoped, tag = 'output window, operand 0']
    #allocation3 [shape = 's32[2]{0}', space=sflag, size = 0x8, scoped, tag = 'scoped memory for tpu_custom_call.1']
    %7 = vsyncpa [#allocation3], 0
    %s8 = scalar_lea.sflag [#allocation3], 1
    %9 = vsyncpa %s8, 0
    loop: start=0, step=1, limit=4
    $region2: #{tpu_custom_call.1} parent=1 // loop_pre_header
      _
    $region3: #{tpu_custom_call.1} parent=1 // loop_header
      %s11 = sphi 0, %s15
      %p12 = scmp.ge.s32.totalorder %s11, 4
      %s18 = sphi 0, %s30
      %s19 = sphi 0, %s26
      %s20 = sphi 0, %s18
      %s21 = sphi 0, %s19
      %s22 = sphi 0, %s20
      %s23 = sphi 0, %s21
      %s33 = sphi 0, %s35
      %s36 = sphi 0, %s33
      %s37 = sphi 0, %s36
      %s53 = sphi 0, %s37
      %s61 = sphi 0, %s63
      %s64 = sphi 0, %s61
      %s65 = sphi 0, %s64
      %s81 = sphi 0, %s65
      %s89 = sphi 0, %s91
      %s92 = sphi 0, %s89
      %s93 = sphi 0, %s92
      %s109 = sphi 0, %s93
    $region4: #{tpu_custom_call.1} parent=1 // loop_header_branch
      %14 = sbr.rel (%p12) target = $region8
    $region5: #{tpu_custom_call.1} parent=1 // loop_body
      %s16 = ssub.s32 %s11, 1
      %s17 = ssub.s32 %s11, 2
      %s24 = sadd.s32 1, %s19
      %p25 = scmp.ge.s32.totalorder %s24, 2
      %s26 = scalar_select %p25, 0, %s24
      %s27 = sadd.s32 1, %s18
      %s28 = scalar_select %p25, %s27, %s18
      %p29 = scmp.ge.s32.totalorder %s28, 1
      %s30 = scalar_select %p29, 0, %s28
      %s31 = ssub.s32 %s18, %s30
      %p32 = scmp.eq.s32.totalorder %s31, 0
      %s34 = sadd.s32 %s33, 1
      %s35 = scalar_select %p32, %s33, %s34
      %p38 = pneg %p32
      %p39 = scmp.eq.s32.totalorder %s11, 1
      %p40 = por %p38, %p39
      %p41 = scmp.ne.s32.totalorder %s33, %s36
      %p42 = scmp.eq.s32.totalorder %s11, 0
      %p43 = por %p41, %p42
      %p44 = scmp.ne.s32.totalorder %s33, %s36
      %p45 = scmp.eq.s32.totalorder %s16, 1
      %p46 = por %p44, %p45
      %p47 = scmp.ne.s32.totalorder %s36, %s37
      %p48 = scmp.eq.s32.totalorder %s16, 0
      %p49 = por %p47, %p48
      %p50 = scmp.ne.s32.totalorder %s36, %s37
      %p51 = scmp.eq.s32.totalorder %s17, 1
      %p52 = por %p50, %p51
      %p54 = scmp.ne.s32.totalorder %s37, %s53
      %p55 = scmp.eq.s32.totalorder %s17, 0
      %p56 = por %p54, %p55
      %s57 = ssub.s32 %s19, %s26
      %s58 = ssub.s32 %s18, %s30
      %s59 = sor.u32 %s57, %s58
      %p60 = scmp.eq.s32.totalorder %s59, 0
      %s62 = sadd.s32 %s61, 1
      %s63 = scalar_select %p60, %s61, %s62
      %p66 = pneg %p60
      %p67 = scmp.eq.s32.totalorder %s11, 1
      %p68 = por %p66, %p67
      %p69 = scmp.ne.s32.totalorder %s61, %s64
      %p70 = scmp.eq.s32.totalorder %s11, 0
      %p71 = por %p69, %p70
      %p72 = scmp.ne.s32.totalorder %s61, %s64
      %p73 = scmp.eq.s32.totalorder %s16, 1
      %p74 = por %p72, %p73
      %p75 = scmp.ne.s32.totalorder %s64, %s65
      %p76 = scmp.eq.s32.totalorder %s16, 0
      %p77 = por %p75, %p76
      %p78 = scmp.ne.s32.totalorder %s64, %s65
      %p79 = scmp.eq.s32.totalorder %s17, 1
      %p80 = por %p78, %p79
      %p82 = scmp.ne.s32.totalorder %s65, %s81
      %p83 = scmp.eq.s32.totalorder %s17, 0
      %p84 = por %p82, %p83
      %s85 = ssub.s32 %s19, %s26
      %s86 = ssub.s32 %s18, %s30
      %s87 = sor.u32 %s85, %s86
      %p88 = scmp.eq.s32.totalorder %s87, 0
      %s90 = sadd.s32 %s89, 1
      %s91 = scalar_select %p88, %s89, %s90
      %p94 = pneg %p88
      %p95 = scmp.eq.s32.totalorder %s11, 1
      %p96 = por %p94, %p95
      %p97 = scmp.ne.s32.totalorder %s89, %s92
      %p98 = scmp.eq.s32.totalorder %s11, 0
      %p99 = por %p97, %p98
      %p100 = scmp.ne.s32.totalorder %s89, %s92
      %p101 = scmp.eq.s32.totalorder %s16, 1
      %p102 = por %p100, %p101
      %p103 = scmp.ne.s32.totalorder %s92, %s93
      %p104 = scmp.eq.s32.totalorder %s16, 0
      %p105 = por %p103, %p104
      %p106 = scmp.ne.s32.totalorder %s92, %s93
      %p107 = scmp.eq.s32.totalorder %s17, 1
      %p108 = por %p106, %p107
      %p110 = scmp.ne.s32.totalorder %s93, %s109
      %p111 = scmp.eq.s32.totalorder %s17, 0
      %p112 = por %p110, %p111
      %p113 = scmp.le.s32.totalorder 1, %s11
      %p114 = scmp.lt.s32.totalorder %s11, 3
      %p115 = pnand %p113, %p114
      %p116 = pneg %p115
      // Predicated region
      $region9: #{tpu_custom_call.1} parent=5 // pred_check
        _
      $region10: #{tpu_custom_call.1} parent=5 // pred_check_branch
        %118 = sbr.rel (%p115) target = $region12
      $region11: #{tpu_custom_call.1} parent=5 // pred_region
        %s119 = ssub.s32 %s11, 1
        // Predicated region
        $region13: #{tpu_custom_call.1} parent=11 // pred_check
          %p120 = pneg %p49
        $region14: #{tpu_custom_call.1} parent=11 // pred_check_branch
          %122 = sbr.rel (%p120) target = $region16
        $region15: #{tpu_custom_call.1} parent=11 // pred_region
          %s123 = smul.u32 2, %s20
          %s124 = ssub.s32 3, %s123
          %p125 = scmp.lt.s32.totalorder %s124, 2
          %s126 = scalar_select %p125, %s124, 2
          %s127 = smul.u32 128, %s126
          %p128 = scmp.lt.s32.totalorder %s123, 2
          %s129 = scalar_select %p128, %s123, 2
          %s130 = smul.addr %s129, 8
          %s131 = scalar_lea.vmem %s0, %s130
          %s132 = smul.u32 2, %s20
          %s133 = ssub.s32 3, %s132
          %p134 = scmp.lt.s32.totalorder %s133, 2
          %s135 = scalar_select %p134, %s133, 2
          %s136 = smul.u32 128, %s135
        $region16: #{tpu_custom_call.1} parent=11 // pred_fallthru
          _
      $region12: #{tpu_custom_call.1} parent=5 // pred_fallthru
        _
      %p137 = scmp.lt.s32.totalorder %s11, 2
      // Predicated region
      $region17: #{tpu_custom_call.1} parent=5 // pred_check
        %p138 = pneg %p137
      $region18: #{tpu_custom_call.1} parent=5 // pred_check_branch
        %140 = sbr.rel (%p138) target = $region20
      $region19: #{tpu_custom_call.1} parent=5 // pred_region
        // Predicated region
        $region21: #{tpu_custom_call.1} parent=19 // pred_check
          %p141 = pneg %p71
        $region22: #{tpu_custom_call.1} parent=19 // pred_check_branch
          %143 = sbr.rel (%p141) target = $region24
        $region23: #{tpu_custom_call.1} parent=19 // pred_region
          %s144 = smul.u32 2, %s18
          %p145 = scmp.lt.s32.totalorder %s19, 1
          %s146 = scalar_select %p145, %s19, 1
          %p147 = scmp.lt.s32.totalorder %s144, 1
          %s148 = scalar_select %p147, %s144, 1
          %s149 = smul.addr %s146, 2
          %s150 = sadd.s32 %s148, %s149
          %s151 = smul.addr %s150, 8
          %s152 = scalar_lea.vmem %s1, %s151
          %s153 = smul.u32 2, %s18
        $region24: #{tpu_custom_call.1} parent=19 // pred_fallthru
          _
      $region20: #{tpu_custom_call.1} parent=5 // pred_fallthru
        _
      %p154 = scmp.le.s32.totalorder 1, %s11
      %p155 = scmp.lt.s32.totalorder %s11, 3
      %p156 = pnand %p154, %p155
      %p157 = pneg %p156
      // Predicated region
      $region25: #{tpu_custom_call.1} parent=5 // pred_check
        _
      $region26: #{tpu_custom_call.1} parent=5 // pred_check_branch
        %159 = sbr.rel (%p156) target = $region28
      $region27: #{tpu_custom_call.1} parent=5 // pred_region
        %s160 = ssub.s32 %s11, 1
        %s161 = smul.u32 2, %s20
        %s162 = ssub.s32 3, %s161
        %p163 = scmp.lt.s32.totalorder %s162, 2
        %s164 = scalar_select %p163, %s162, 2
        %s165 = smul.u32 128, %s164
        %p166 = scmp.lt.s32.totalorder %s161, 2
        %s167 = scalar_select %p166, %s161, 2
        %s168 = smul.addr %s167, 8
        %s169 = scalar_lea.vmem %s0, %s168
        %p170 = pneg %p49
        %p171 = pneg %p46
        %s172 = smul.u32 2, %s20
        %p173 = scmp.lt.s32.totalorder %s21, 1
        %s174 = scalar_select %p173, %s21, 1
        %p175 = scmp.lt.s32.totalorder %s172, 1
        %s176 = scalar_select %p175, %s172, 1
        %s177 = smul.addr %s174, 2
        %s178 = sadd.s32 %s176, %s177
        %s179 = smul.addr %s178, 8
        %s180 = scalar_lea.vmem %s1, %s179
        %p181 = pneg %p77
        %p182 = pneg %p74
        %p183 = pneg %p105
        %p184 = pneg %p102
        %s185 = sand.u32 %s92, 1
        %s186 = scalar_lea.sflag [#allocation3], %s185
        %s187 = sand.u32 %s92, 1
        %s188 = smul.addr %s187, 16
        %s189 = scalar_lea.vmem [#allocation2], %s188
        %s190 = smul.u32 2, %s20
        %s191 = ssub.s32 3, %s190
        %p192 = scmp.lt.s32.totalorder %s191, 2
        %s193 = scalar_select %p192, %s191, 2
        %s194 = smul.u32 128, %s193
        %p195 = scmp.lt.s32.totalorder %s190, 2
        %s196 = scalar_select %p195, %s190, 2
        %s197 = smul.addr %s196, 8
        %s198 = scalar_lea.vmem %s0, %s197
        %s199 = smul.u32 2, %s20
        %s200 = ssub.s32 3, %s199
        %p201 = scmp.lt.s32.totalorder %s200, 2
        %s202 = scalar_select %p201, %s200, 2
        %s203 = smul.u32 128, %s202
        %s204 = smul.u32 2, %s20
        %p205 = scmp.lt.s32.totalorder %s21, 1
        %s206 = scalar_select %p205, %s21, 1
        %p207 = scmp.lt.s32.totalorder %s204, 1
        %s208 = scalar_select %p207, %s204, 1
        %s209 = smul.addr %s206, 2
        %s210 = sadd.s32 %s208, %s209
        %s211 = smul.addr %s210, 8
        %s212 = scalar_lea.vmem %s1, %s211
        %s213 = smul.u32 2, %s20
        %s214 = smul.u32 2, %s20
        %v215 = vld [vmem:[%s198] sm:$0xff]
        %v216 = vld [vmem:[%s198 + $0x8] sm:$0xff]
        %v217 = vld [vmem:[%s212] sm:$0xff]
        %v218 = vld [vmem:[%s212 + $0x8] sm:$0xff]
        %220 = vset.pattern.permute.xlu0 0
        %221 = vperm.xlu0 %220, %v217
        %v222 = vpop.permute.xlu0 %221
        %225 = vset.pattern.permute.xlu0 0
        %226 = vperm.xlu0 %225, %v218
        %v227 = vpop.permute.xlu0 %226
        %v229 = vmul.f32 %v215, %v222
        %v230 = vmul.f32 %v216, %v227
        %231 = vst [vmem:[%s189] sm:$0xff] %v229
        %232 = vst [vmem:[%s189 + $0x8] sm:$0xff] %v230
        %s233 = sand.u32 %s92, 1
        %s234 = scalar_lea.sflag [#allocation3], %s233
        %s235 = sand.u32 %s92, 1
        %s236 = smul.addr %s235, 16
        %s237 = scalar_lea.vmem [#allocation2], %s236
        // Predicated region
        $region29: #{tpu_custom_call.1} parent=27 // pred_check
          %p238 = pneg %p102
        $region30: #{tpu_custom_call.1} parent=27 // pred_check_branch
          %240 = sbr.rel (%p238) target = $region32
        $region31: #{tpu_custom_call.1} parent=27 // pred_region
          %s241 = smul.u32 2, %s20
          %s243 = ssub.s32 256, 256
          %244 = vsyncadd %s234, %s243
          %s245 = smul.addr %s21, 2
          %s246 = sadd.s32 %s241, %s245
          %s247 = smul.addr %s246, 128
          %s248 = scalar_lea.hbm %s2, %s247
          %s249 = sshll.u32 %s237, 4
          %s250 = int_to_ptr.vmem [resolvable:$true] %s249
          %255 = dma.vmem_to_hbm [thread:$0]  %s250, 256, %s248, %s234, 128, 128, 8
        $region32: #{tpu_custom_call.1} parent=27 // pred_fallthru
          _
      $region28: #{tpu_custom_call.1} parent=5 // pred_fallthru
        _
      %p256 = scmp.le.s32.totalorder 2, %s11
      // Predicated region
      $region33: #{tpu_custom_call.1} parent=5 // pred_check
        %p257 = pneg %p256
      $region34: #{tpu_custom_call.1} parent=5 // pred_check_branch
        %259 = sbr.rel (%p257) target = $region36
      $region35: #{tpu_custom_call.1} parent=5 // pred_region
        %s260 = ssub.s32 %s11, 2
        // Predicated region
        $region37: #{tpu_custom_call.1} parent=35 // pred_check
          %p261 = pneg %p108
        $region38: #{tpu_custom_call.1} parent=35 // pred_check_branch
          %263 = sbr.rel (%p261) target = $region40
        $region39: #{tpu_custom_call.1} parent=35 // pred_region
          %s264 = sand.u32 %s93, 1
          %s265 = scalar_lea.sflag [#allocation3], %s264
          %s266 = sand.u32 %s93, 1
          %s267 = smul.addr %s266, 16
          %s268 = scalar_lea.vmem [#allocation2], %s267
          %269 = dma.done %s265, 256
        $region40: #{tpu_custom_call.1} parent=35 // pred_fallthru
          _
      $region36: #{tpu_custom_call.1} parent=5 // pred_fallthru
        _
    $region6: #{tpu_custom_call.1} parent=1 // loop_footer
      %s15 = sadd.s32 1, %s11
    $region7: #{tpu_custom_call.1} parent=1 // loop_footer_branch
      %10 = sbr.rel target = $region3
    $region8: #{tpu_custom_call.1} parent=1 // loop_exit
      _
    %270 = vsyncpa [#allocation3], 1
    %s271 = scalar_lea.sflag [#allocation3], 1
    %272 = vsyncpa %s271, 1

</llo_original>
